<compile_context>
chip_gen: v7x
topology: tpu7x:2x2x1
jax: 0.10.0
libtpu: 0.0.40
codegen_flags: <defaults>
</compile_context>

<pallas_src>
import functools

import jax
import jax.numpy as jnp
from jax import lax
from jax.experimental import pallas as pl
from jax.experimental.pallas import tpu as pltpu

POOL_K = 7
POOL_PAD = 3
DW_K = 11
DW_PAD = 5
NEG = -3.0e38   # effective -inf for max-pool masking; safe because every 7x7
                # window (pad=3, stride=1) always contains >= 1 real pixel.
VPAD = 8        # sublane-aligned H padding of the v_conv scratch (>= DW_PAD)


def _sigmoid(x):
    # exp() issues on the EUP; one f32 divide per activation is cheap.
    return 1.0 / (1.0 + jnp.exp(-x))


def _pack_kernel_params(params, W, P):
    """Precompute lane-tiled / block-structured parameters (wrapper-side XLA)."""
    w1a, w1b, b1, wh, bh, wv, bv, w2, b2 = params
    C = w1a.shape[0]
    f32 = jnp.float32
    WC = W * C
    L = P * WC
    eye_w = jnp.eye(W, dtype=f32)
    eye_p = jnp.eye(P, dtype=f32)

    # W-direction 7-tap average sum (and 1/49) folded into conv1's avg half.
    # band[w', w] = 1 iff |w' - w| <= 3 (zero padding handled implicitly).
    band = sum(jnp.eye(W, W, k=k, dtype=f32)
               for k in range(-POOL_PAD, POOL_PAD + 1))
    m1a = jnp.kron(eye_p, jnp.kron(band, w1a)) * (1.0 / float(POOL_K * POOL_K))
    m1b = jnp.kron(eye_p, jnp.kron(eye_w, w1b))
    m2 = jnp.kron(eye_p, jnp.kron(eye_w, w2))

    # Depthwise (1, 11) conv as a banded lane matmul, block-diag over P images.
    mh = jnp.kron(eye_p,
                  sum(jnp.kron(jnp.eye(W, W, k=DW_PAD - t, dtype=f32),
                               jnp.diag(wh[t]))
                      for t in range(DW_K)))

    def lane_tile(b):                          # (1, C) -> (1, L)
        return jnp.tile(b.reshape(1, C), (1, P * W)).astype(f32)

    b1l = lane_tile(b1)
    bhl = lane_tile(bh)
    wvl = jnp.tile(wv, (1, P * W)).astype(f32)             # (DW_K, L)
    b2l = lane_tile(bv) @ m2 + lane_tile(b2)                # bv folded into b2

    # Additive NEG masks for the max-pool W-pass roll tree (d = +1,-1,+2,-2).
    lane = jnp.arange(L)
    w_of = (lane // C) % W

    def wmask(d):
        ok = (w_of + d >= 0) & (w_of + d < W)
        return jnp.where(ok, 0.0, NEG).astype(f32)

    wneg = jnp.stack([wmask(1), wmask(-1), wmask(2), wmask(-2)], axis=0)

    return m1a, m1b, b1l, mh, bhl, wvl, m2, b2l, wneg


def _caa_kernel(H, W, C, P, Nb,
                xz_ref, wneg_ref, m1a_ref, m1b_ref, b1_ref, mh_ref, bh_ref,
                wv_ref, m2_ref, b2_ref, out_ref, vh_s):
    L = P * W * C
    R = Nb * H

    # ---- 7x7 pools, H pass: shift-doubling tree over the zero-padded ref ----
    x0 = xz_ref[:, 0:H + 5, :]
    x1 = xz_ref[:, 1:H + 6, :]

    u = lax.broadcasted_iota(jnp.int32, (H + 5, L), 0)

    def neg_rows(shift):
        up = u + shift                         # padded-row index being read
        ok = (up >= POOL_PAD) & (up < H + POOL_PAD)
        return jnp.where(ok, 0.0, NEG)

    a_s = x0 + x1
    a_m = jnp.maximum(x0 + neg_rows(0), x1 + neg_rows(1))

    b_s = a_s[:, 0:H + 3, :] + a_s[:, 2:H + 5, :]
    b_m = jnp.maximum(a_m[:, 0:H + 3, :], a_m[:, 2:H + 5, :])

    colsum = b_s[:, 0:H, :] + a_s[:, 4:H + 4, :] + xz_ref[:, 6:H + 6, :]
    colmax = jnp.maximum(b_m[:, 0:H, :], b_m[:, 3:H + 3, :])

    cs2 = colsum.reshape(R, L)
    cm2 = colmax.reshape(R, L)

    # ---- max pool W pass: in-register XLU lane rolls + additive NEG masks ----
    def wroll(v, d, j):
        rolled = pltpu.roll(v, (-d * C) % L, axis=1)     # brings v at (w + d)
        return rolled + wneg_ref[j:j + 1, :]

    m3 = jnp.maximum(cm2, jnp.maximum(wroll(cm2, 1, 0), wroll(cm2, -1, 1)))
    mx = jnp.maximum(m3, jnp.maximum(wroll(m3, 2, 2), wroll(m3, -2, 3)))

    # ---- conv1 (1x1, 2C->C, BN folded; avg W pass + 1/49 inside m1a) + SiLU --
    z = (jnp.dot(cs2, m1a_ref[...], preferred_element_type=jnp.float32)
         + jnp.dot(mx, m1b_ref[...], preferred_element_type=jnp.float32)
         + b1_ref[...])
    z = z * _sigmoid(z)                                    # SiLU

    # ---- h_conv: depthwise (1, 11) conv as a banded lane matmul + bias ------
    hm = jnp.dot(z, mh_ref[...], preferred_element_type=jnp.float32) + bh_ref[...]

    # ---- v_conv: depthwise (11, 1) via a zero-bordered scratch (sublane taps)
    #      border writes are 8 rows each (tiny) and unconditional: a
    #      pl.when(program_id==0) hoist would break under megacore sharding.
    vh_s[:, 0:VPAD, :] = jnp.zeros((Nb, VPAD, L), jnp.float32)
    vh_s[:, VPAD + H:VPAD + H + VPAD, :] = jnp.zeros((Nb, VPAD, L), jnp.float32)
    vh_s[:, VPAD:VPAD + H, :] = hm.reshape(Nb, H, L)
    base = VPAD - DW_PAD
    v = vh_s[:, base:base + H, :] * wv_ref[0:1, :]
    for k in range(1, DW_K):
        v = v + vh_s[:, base + k:base + k + H, :] * wv_ref[k:k + 1, :]
    # (bv is folded into b2 in the wrapper)

    # ---- conv2 (1x1, BN folded) + SiLU, then the final Sigmoid --------------
    z2 = (jnp.dot(v.reshape(R, L), m2_ref[...], preferred_element_type=jnp.float32)
          + b2_ref[...])
    z2 = z2 * _sigmoid(z2)                                 # SiLU
    out_ref[...] = _sigmoid(z2).astype(out_ref.dtype)      # Sigmoid


def caa_forward(x, params):
    """x: (N, H, W, C) float32.  Returns the attention map (N, H, W, C)."""
    N, H, W, C = x.shape
    WC = W * C
    P = max(1, 128 // WC)          # images packed along lanes -> >=128 lanes
    L = P * WC
    HP = H + 2 * POOL_PAD
    VHP = H + 2 * VPAD

    # Pad batch so it divides into P-image lane groups (padded images are zero
    # and sliced off at the end).
    Npad = ((N + P - 1) // P) * P
    xb = x
    if Npad != N:
        xb = jnp.concatenate(
            [x, jnp.zeros((Npad - N, H, W, C), x.dtype)], axis=0)
    G = Npad // P                  # number of lane groups

    # Single lane-packed, H-zero-padded copy of the input (layout plumbing
    # stays in XLA; the kernel never refills padded copies of x).
    xp = xb.reshape(G, P, H, W, C).transpose(0, 2, 1, 3, 4).reshape(G, H, L)
    xz = jnp.pad(xp, ((0, 0), (POOL_PAD, POOL_PAD), (0, 0)))

    m1a, m1b, b1l, mh, bhl, wvl, m2, b2l, wneg = _pack_kernel_params(params, W, P)

    # Batch tiling: enough grid blocks to pipeline DMA / feed both v7x cores,
    # each block a few tens of KiB.
    bytes_per_group = 4 * (HP * L + H * L + VHP * L)
    nb_cap = max(1, (1 << 20) // max(bytes_per_group, 1))
    divs = [d for d in range(1, G + 1) if G % d == 0 and d <= nb_cap]
    multi = [d for d in divs if G // d >= 2]
    Nb = max(multi) if multi else max(divs)
    if H % 8 != 0:                 # keep output blocks (8,128)-aligned
        Nb = G
    num_blocks = G // Nb
    R = Nb * H

    kernel = functools.partial(_caa_kernel, H, W, C, P, Nb)

    in_specs = [
        pl.BlockSpec((Nb, HP, L), lambda b: (b, 0, 0)),   # x (H-zero-pad, packed)
        pl.BlockSpec((4, L), lambda b: (0, 0)),           # wneg (max W-pass masks)
        pl.BlockSpec((L, L), lambda b: (0, 0)),           # m1a (avg W pool + conv1)
        pl.BlockSpec((L, L), lambda b: (0, 0)),           # m1b (conv1 max half)
        pl.BlockSpec((1, L), lambda b: (0, 0)),           # b1
        pl.BlockSpec((L, L), lambda b: (0, 0)),           # mh (depthwise 1x11)
        pl.BlockSpec((1, L), lambda b: (0, 0)),           # bh
        pl.BlockSpec((DW_K, L), lambda b: (0, 0)),        # wv lane-tiled
        pl.BlockSpec((L, L), lambda b: (0, 0)),           # m2 (conv2)
        pl.BlockSpec((1, L), lambda b: (0, 0)),           # b2 (bv folded in)
    ]
    out_spec = pl.BlockSpec((R, L), lambda b: (b, 0))

    param_bytes = 4 * (4 * L * L + (DW_K + 8) * L)
    block_bytes = 4 * (Nb * HP * L + R * L + Nb * VHP * L)
    vmem_limit = int(min(32 * 1024 * 1024,
                         max(4 * 1024 * 1024, 3 * (block_bytes + param_bytes))))

    y = pl.pallas_call(
        kernel,
        out_shape=jax.ShapeDtypeStruct((G * H, L), x.dtype),
        grid_spec=pltpu.PrefetchScalarGridSpec(
            num_scalar_prefetch=0,
            grid=(num_blocks,),
            in_specs=in_specs,
            out_specs=out_spec,
            scratch_shapes=[pltpu.VMEM((Nb, VHP, L), jnp.float32)]),
        compiler_params=pltpu.CompilerParams(
            dimension_semantics=("parallel",),
            vmem_limit_bytes=vmem_limit),
    )(xz, wneg, m1a, m1b, b1l, mh, bhl, wvl, m2, b2l)

    y = (y.reshape(G, H, P, W, C)
          .transpose(0, 2, 1, 3, 4)
          .reshape(Npad, H, W, C))
    return y[:N]


def init_params(key, C):
    """Deterministic synthetic parameters; BatchNorm folded (inference mode)."""
    ks = jax.random.split(key, 14)

    def fold_bn(w, kg, kb, km, kv, eps):
        g = 1.0 + 0.1 * jax.random.normal(kg, (C,), jnp.float32)
        beta = 0.1 * jax.random.normal(kb, (C,), jnp.float32)
        mean = 0.1 * jax.random.normal(km, (C,), jnp.float32)
        var = jax.random.uniform(kv, (C,), jnp.float32, minval=0.5, maxval=1.5)
        s = g / jnp.sqrt(var + eps)
        return w * s[None, :], (beta - mean * s)[None, :]

    # conv1: (2C -> C), no conv bias, BN(eps=1e-3)
    w1 = 0.2 * jax.random.normal(ks[0], (2 * C, C), jnp.float32)
    w1f, b1 = fold_bn(w1, ks[1], ks[2], ks[3], ks[4], 1e-3)
    w1a, w1b = w1f[:C], w1f[C:]

    # depthwise convs (bias=True, no norm/act)
    wh = 0.2 * jax.random.normal(ks[5], (DW_K, C), jnp.float32)
    bh = 0.1 * jax.random.normal(ks[6], (1, C), jnp.float32)
    wv = 0.2 * jax.random.normal(ks[7], (DW_K, C), jnp.float32)
    bv = 0.1 * jax.random.normal(ks[8], (1, C), jnp.float32)

    # conv2: (C -> C), no conv bias, BN(eps=1e-3)
    w2 = 0.2 * jax.random.normal(ks[9], (C, C), jnp.float32)
    w2f, b2 = fold_bn(w2, ks[10], ks[11], ks[12], ks[13], 1e-3)

    return (w1a, w1b, b1, wh, bh, wv, bv, w2f, b2)


def ref_caa(x, params):
    """Pure-JAX reference (NHWC) mirroring the PyTorch forward semantics."""
    w1a, w1b, b1, wh, bh, wv, bv, w2, b2 = params
    N, H, W, C = x.shape
    pad = [(0, 0), (POOL_PAD, POOL_PAD), (POOL_PAD, POOL_PAD), (0, 0)]
    avg = lax.reduce_window(x, jnp.float32(0.0), lax.add,
                            (1, POOL_K, POOL_K, 1), (1, 1, 1, 1), pad)
    avg = avg / float(POOL_K * POOL_K)
    mx = lax.reduce_window(x, jnp.float32(-jnp.inf), lax.max,
                           (1, POOL_K, POOL_K, 1), (1, 1, 1, 1), pad)

    def silu(t):
        return t * jax.nn.sigmoid(t)

    z = (jnp.einsum('nhwc,cd->nhwd', avg, w1a)
         + jnp.einsum('nhwc,cd->nhwd', mx, w1b) + b1[0])
    z = silu(z)

    zp = jnp.pad(z, ((0, 0), (0, 0), (DW_PAD, DW_PAD), (0, 0)))
    h = sum(zp[:, :, k:k + W, :] * wh[k] for k in range(DW_K)) + bh[0]

    hp = jnp.pad(h, ((0, 0), (DW_PAD, DW_PAD), (0, 0), (0, 0)))
    v = sum(hp[:, k:k + H, :, :] * wv[k] for k in range(DW_K)) + bv[0]

    z2 = jnp.einsum('nhwc,cd->nhwd', v, w2) + b2[0]
    z2 = silu(z2)
    return jax.nn.sigmoid(z2)


if __name__ == "__main__":
    key = jax.random.PRNGKey(0)
    k_x, k_p = jax.random.split(key)

    N, C, H, W = 2, 4, 16, 16
    x_nchw = jax.random.normal(k_x, (N, C, H, W), jnp.float32)   # PyTorch layout
    x = jnp.transpose(x_nchw, (0, 2, 3, 1))                      # -> NHWC

    params = init_params(k_p, C)

    caa = jax.jit(caa_forward)
    out = caa(x, params)
    out = jax.block_until_ready(out)

    ref = ref_caa(x, params)
    assert out.shape == (N, H, W, C)
    assert bool(jnp.all(jnp.isfinite(out)))
    # Tolerance covers MXU f32 contraction rounding (the kernel contracts
    # 128-wide fused kron matrices, the reference contracts length-4 channels);
    # structural bugs (wrong taps / band offsets / roll directions) produce
    # errors >= 1e-2.
    err = float(jnp.max(jnp.abs(out - ref)))
    assert err < 5e-3, err

    print("KERNEL_OK")
</pallas_src>

<mosaic_0001>
module attributes {stable_mosaic.version = 11 : i64} {
  func.func @_caa_kernel(%arg0: i32, %arg1: memref<1x22x128xf32, #tpu.memory_space<vmem>>, %arg2: memref<4x128xf32, #tpu.memory_space<vmem>>, %arg3: memref<128x128xf32, #tpu.memory_space<vmem>>, %arg4: memref<128x128xf32, #tpu.memory_space<vmem>>, %arg5: memref<1x128xf32, #tpu.memory_space<vmem>>, %arg6: memref<128x128xf32, #tpu.memory_space<vmem>>, %arg7: memref<1x128xf32, #tpu.memory_space<vmem>>, %arg8: memref<11x128xf32, #tpu.memory_space<vmem>>, %arg9: memref<128x128xf32, #tpu.memory_space<vmem>>, %arg10: memref<1x128xf32, #tpu.memory_space<vmem>>, %arg11: memref<16x128xf32, #tpu.memory_space<vmem>>, %arg12: memref<1x32x128xf32, #tpu.memory_space<vmem>>) attributes {dimension_semantics = [#tpu.dimension_semantics<parallel>], iteration_bounds = array<i64: 1>, scalar_prefetch = 0 : i64, scratch_operands = 1 : i64, tpu.core_type = #tpu.core_type<tc>, window_params = [{transform_indices = @transform_0, window_bounds = array<i64: 1, 22, 128>}, {pipeline_mode = #tpu.pipeline_mode<synchronous>, transform_indices = @transform_1, window_bounds = array<i64: 4, 128>}, {pipeline_mode = #tpu.pipeline_mode<synchronous>, transform_indices = @transform_2, window_bounds = array<i64: 128, 128>}, {pipeline_mode = #tpu.pipeline_mode<synchronous>, transform_indices = @transform_3, window_bounds = array<i64: 128, 128>}, {pipeline_mode = #tpu.pipeline_mode<synchronous>, transform_indices = @transform_4, window_bounds = array<i64: 1, 128>}, {pipeline_mode = #tpu.pipeline_mode<synchronous>, transform_indices = @transform_5, window_bounds = array<i64: 128, 128>}, {pipeline_mode = #tpu.pipeline_mode<synchronous>, transform_indices = @transform_6, window_bounds = array<i64: 1, 128>}, {pipeline_mode = #tpu.pipeline_mode<synchronous>, transform_indices = @transform_7, window_bounds = array<i64: 11, 128>}, {pipeline_mode = #tpu.pipeline_mode<synchronous>, transform_indices = @transform_8, window_bounds = array<i64: 128, 128>}, {pipeline_mode = #tpu.pipeline_mode<synchronous>, transform_indices = @transform_9, window_bounds = array<i64: 1, 128>}, {transform_indices = @transform_10, window_bounds = array<i64: 16, 128>}]} {
    %c0 = arith.constant 0 : index
    %c0_0 = arith.constant 0 : index
    %c0_1 = arith.constant 0 : index
    %0 = vector.load %arg1[%c0, %c0_0, %c0_1] : memref<1x22x128xf32, #tpu.memory_space<vmem>>, vector<1x21x128xf32>
    %c0_2 = arith.constant 0 : index
    %c1 = arith.constant 1 : index
    %c0_3 = arith.constant 0 : index
    %1 = vector.load %arg1[%c0_2, %c1, %c0_3] : memref<1x22x128xf32, #tpu.memory_space<vmem>>, vector<1x21x128xf32>
    %2 = tpu.iota {dimensions = array<i32: 0>} : vector<21x128xi32>
    %3 = arith.addf %0, %1 : vector<1x21x128xf32>
    %c0_i32 = arith.constant 0 : i32
    %4 = vector.broadcast %c0_i32 : i32 to vector<21x128xi32>
    %5 = arith.addi %2, %4 : vector<21x128xi32>
    %c3_i32 = arith.constant 3 : i32
    %6 = vector.broadcast %c3_i32 : i32 to vector<21x128xi32>
    %7 = arith.cmpi sge, %5, %6 : vector<21x128xi32>
    %c19_i32 = arith.constant 19 : i32
    %8 = vector.broadcast %c19_i32 : i32 to vector<21x128xi32>
    %9 = arith.cmpi slt, %5, %8 : vector<21x128xi32>
    %10 = arith.andi %7, %9 : vector<21x128xi1>
    %cst = arith.constant 0.000000e+00 : f32
    %cst_4 = arith.constant -3.000000e+38 : f32
    %11 = vector.broadcast %cst : f32 to vector<21x128xf32>
    %12 = vector.broadcast %cst_4 : f32 to vector<21x128xf32>
    %13 = arith.select %10, %11, %12 : vector<21x128xi1>, vector<21x128xf32>
    %14 = vector.shape_cast %13 : vector<21x128xf32> to vector<1x21x128xf32>
    %15 = arith.addf %0, %14 : vector<1x21x128xf32>
    %c1_i32 = arith.constant 1 : i32
    %16 = vector.broadcast %c1_i32 : i32 to vector<21x128xi32>
    %17 = arith.addi %2, %16 : vector<21x128xi32>
    %c3_i32_5 = arith.constant 3 : i32
    %18 = vector.broadcast %c3_i32_5 : i32 to vector<21x128xi32>
    %19 = arith.cmpi sge, %17, %18 : vector<21x128xi32>
    %c19_i32_6 = arith.constant 19 : i32
    %20 = vector.broadcast %c19_i32_6 : i32 to vector<21x128xi32>
    %21 = arith.cmpi slt, %17, %20 : vector<21x128xi32>
    %22 = arith.andi %19, %21 : vector<21x128xi1>
    %cst_7 = arith.constant 0.000000e+00 : f32
    %cst_8 = arith.constant -3.000000e+38 : f32
    %23 = vector.broadcast %cst_7 : f32 to vector<21x128xf32>
    %24 = vector.broadcast %cst_8 : f32 to vector<21x128xf32>
    %25 = arith.select %22, %23, %24 : vector<21x128xi1>, vector<21x128xf32>
    %26 = vector.shape_cast %25 : vector<21x128xf32> to vector<1x21x128xf32>
    %27 = arith.addf %1, %26 : vector<1x21x128xf32>
    %28 = arith.maximumf %15, %27 : vector<1x21x128xf32>
    %29 = vector.extract_strided_slice %3 {offsets = [0, 0, 0], sizes = [1, 19, 128], strides = [1, 1, 1]} : vector<1x21x128xf32> to vector<1x19x128xf32>
    %30 = vector.extract_strided_slice %3 {offsets = [0, 2, 0], sizes = [1, 19, 128], strides = [1, 1, 1]} : vector<1x21x128xf32> to vector<1x19x128xf32>
    %31 = arith.addf %29, %30 : vector<1x19x128xf32>
    %32 = vector.extract_strided_slice %28 {offsets = [0, 0, 0], sizes = [1, 19, 128], strides = [1, 1, 1]} : vector<1x21x128xf32> to vector<1x19x128xf32>
    %33 = vector.extract_strided_slice %28 {offsets = [0, 2, 0], sizes = [1, 19, 128], strides = [1, 1, 1]} : vector<1x21x128xf32> to vector<1x19x128xf32>
    %34 = arith.maximumf %32, %33 : vector<1x19x128xf32>
    %35 = vector.extract_strided_slice %31 {offsets = [0, 0, 0], sizes = [1, 16, 128], strides = [1, 1, 1]} : vector<1x19x128xf32> to vector<1x16x128xf32>
    %36 = vector.extract_strided_slice %3 {offsets = [0, 4, 0], sizes = [1, 16, 128], strides = [1, 1, 1]} : vector<1x21x128xf32> to vector<1x16x128xf32>
    %37 = arith.addf %35, %36 : vector<1x16x128xf32>
    %c0_9 = arith.constant 0 : index
    %c6 = arith.constant 6 : index
    %c0_10 = arith.constant 0 : index
    %38 = vector.load %arg1[%c0_9, %c6, %c0_10] : memref<1x22x128xf32, #tpu.memory_space<vmem>>, vector<1x16x128xf32>
    %39 = arith.addf %37, %38 : vector<1x16x128xf32>
    %40 = vector.extract_strided_slice %34 {offsets = [0, 0, 0], sizes = [1, 16, 128], strides = [1, 1, 1]} : vector<1x19x128xf32> to vector<1x16x128xf32>
    %41 = vector.extract_strided_slice %34 {offsets = [0, 3, 0], sizes = [1, 16, 128], strides = [1, 1, 1]} : vector<1x19x128xf32> to vector<1x16x128xf32>
    %42 = arith.maximumf %40, %41 : vector<1x16x128xf32>
    %43 = vector.shape_cast %39 : vector<1x16x128xf32> to vector<16x128xf32>
    %44 = vector.shape_cast %42 : vector<1x16x128xf32> to vector<16x128xf32>
    %c124_i32 = arith.constant 124 : i32
    %45 = tpu.dynamic_rotate %44 by %c124_i32 dim 1 : vector<16x128xf32>, i32 -> vector<16x128xf32>
    %c0_11 = arith.constant 0 : index
    %c0_12 = arith.constant 0 : index
    %46 = vector.load %arg2[%c0_11, %c0_12] : memref<4x128xf32, #tpu.memory_space<vmem>>, vector<1x128xf32>
    %47 = vector.broadcast %46 : vector<1x128xf32> to vector<16x128xf32>
    %48 = arith.addf %45, %47 : vector<16x128xf32>
    %c4_i32 = arith.constant 4 : i32
    %49 = tpu.dynamic_rotate %44 by %c4_i32 dim 1 : vector<16x128xf32>, i32 -> vector<16x128xf32>
    %c1_13 = arith.constant 1 : index
    %c0_14 = arith.constant 0 : index
    %50 = vector.load %arg2[%c1_13, %c0_14] : memref<4x128xf32, #tpu.memory_space<vmem>>, vector<1x128xf32>
    %51 = vector.broadcast %50 : vector<1x128xf32> to vector<16x128xf32>
    %52 = arith.addf %49, %51 : vector<16x128xf32>
    %53 = arith.maximumf %48, %52 : vector<16x128xf32>
    %54 = arith.maximumf %44, %53 : vector<16x128xf32>
    %c120_i32 = arith.constant 120 : i32
    %55 = tpu.dynamic_rotate %54 by %c120_i32 dim 1 : vector<16x128xf32>, i32 -> vector<16x128xf32>
    %c2 = arith.constant 2 : index
    %c0_15 = arith.constant 0 : index
    %56 = vector.load %arg2[%c2, %c0_15] : memref<4x128xf32, #tpu.memory_space<vmem>>, vector<1x128xf32>
    %57 = vector.broadcast %56 : vector<1x128xf32> to vector<16x128xf32>
    %58 = arith.addf %55, %57 : vector<16x128xf32>
    %c8_i32 = arith.constant 8 : i32
    %59 = tpu.dynamic_rotate %54 by %c8_i32 dim 1 : vector<16x128xf32>, i32 -> vector<16x128xf32>
    %c3 = arith.constant 3 : index
    %c0_16 = arith.constant 0 : index
    %60 = vector.load %arg2[%c3, %c0_16] : memref<4x128xf32, #tpu.memory_space<vmem>>, vector<1x128xf32>
    %61 = vector.broadcast %60 : vector<1x128xf32> to vector<16x128xf32>
    %62 = arith.addf %59, %61 : vector<16x128xf32>
    %63 = arith.maximumf %58, %62 : vector<16x128xf32>
    %64 = arith.maximumf %54, %63 : vector<16x128xf32>
    %c0_17 = arith.constant 0 : index
    %c0_18 = arith.constant 0 : index
    %65 = vector.load %arg3[%c0_17, %c0_18] : memref<128x128xf32, #tpu.memory_space<vmem>>, vector<128x128xf32>
    %cst_19 = arith.constant dense<0.000000e+00> : vector<16x128xf32>
    %66 = tpu.matmul %43, %65, %cst_19 {dimension_numbers = #tpu.dot_dimension_numbers<[1], [0], [0], [1], [0, 0, 1, 1], [], []>} : vector<16x128xf32>, vector<128x128xf32>, vector<16x128xf32> -> vector<16x128xf32>
    %c0_20 = arith.constant 0 : index
    %c0_21 = arith.constant 0 : index
    %67 = vector.load %arg4[%c0_20, %c0_21] : memref<128x128xf32, #tpu.memory_space<vmem>>, vector<128x128xf32>
    %cst_22 = arith.constant dense<0.000000e+00> : vector<16x128xf32>
    %68 = tpu.matmul %64, %67, %cst_22 {dimension_numbers = #tpu.dot_dimension_numbers<[1], [0], [0], [1], [0, 0, 1, 1], [], []>} : vector<16x128xf32>, vector<128x128xf32>, vector<16x128xf32> -> vector<16x128xf32>
    %69 = arith.addf %66, %68 : vector<16x128xf32>
    %c0_23 = arith.constant 0 : index
    %c0_24 = arith.constant 0 : index
    %70 = vector.load %arg5[%c0_23, %c0_24] : memref<1x128xf32, #tpu.memory_space<vmem>>, vector<1x128xf32>
    %71 = vector.broadcast %70 : vector<1x128xf32> to vector<16x128xf32>
    %72 = arith.addf %69, %71 : vector<16x128xf32>
    %cst_25 = arith.constant 0.000000e+00 : f32
    %73 = vector.broadcast %cst_25 : f32 to vector<16x128xf32>
    %74 = arith.subf %73, %72 : vector<16x128xf32>
    %75 = math.exp %74 : vector<16x128xf32>
    %cst_26 = arith.constant 1.000000e+00 : f32
    %76 = vector.broadcast %cst_26 : f32 to vector<16x128xf32>
    %77 = arith.addf %76, %75 : vector<16x128xf32>
    %cst_27 = arith.constant 1.000000e+00 : f32
    %78 = vector.broadcast %cst_27 : f32 to vector<16x128xf32>
    %79 = arith.divf %78, %77 : vector<16x128xf32>
    %80 = arith.mulf %72, %79 : vector<16x128xf32>
    %c0_28 = arith.constant 0 : index
    %c0_29 = arith.constant 0 : index
    %81 = vector.load %arg6[%c0_28, %c0_29] : memref<128x128xf32, #tpu.memory_space<vmem>>, vector<128x128xf32>
    %cst_30 = arith.constant dense<0.000000e+00> : vector<16x128xf32>
    %82 = tpu.matmul %80, %81, %cst_30 {dimension_numbers = #tpu.dot_dimension_numbers<[1], [0], [0], [1], [0, 0, 1, 1], [], []>} : vector<16x128xf32>, vector<128x128xf32>, vector<16x128xf32> -> vector<16x128xf32>
    %c0_31 = arith.constant 0 : index
    %c0_32 = arith.constant 0 : index
    %83 = vector.load %arg7[%c0_31, %c0_32] : memref<1x128xf32, #tpu.memory_space<vmem>>, vector<1x128xf32>
    %84 = vector.broadcast %83 : vector<1x128xf32> to vector<16x128xf32>
    %85 = arith.addf %82, %84 : vector<16x128xf32>
    %cst_33 = arith.constant 0.000000e+00 : f32
    %86 = vector.broadcast %cst_33 : f32 to vector<1x8x128xf32>
    %c0_34 = arith.constant 0 : index
    %c0_35 = arith.constant 0 : index
    %c0_36 = arith.constant 0 : index
    %87 = vector.load %arg12[%c0_34, %c0_35, %c0_36] : memref<1x32x128xf32, #tpu.memory_space<vmem>>, vector<1x8x128xf32>
    tpu.vector_store %arg12[%c0_34, %c0_35, %c0_36], %86 {strides = array<i32>} : memref<1x32x128xf32, #tpu.memory_space<vmem>>, vector<1x8x128xf32>,
    %cst_37 = arith.constant 0.000000e+00 : f32
    %88 = vector.broadcast %cst_37 : f32 to vector<1x8x128xf32>
    %c0_38 = arith.constant 0 : index
    %c24 = arith.constant 24 : index
    %c0_39 = arith.constant 0 : index
    %89 = vector.load %arg12[%c0_38, %c24, %c0_39] : memref<1x32x128xf32, #tpu.memory_space<vmem>>, vector<1x8x128xf32>
    tpu.vector_store %arg12[%c0_38, %c24, %c0_39], %88 {strides = array<i32>} : memref<1x32x128xf32, #tpu.memory_space<vmem>>, vector<1x8x128xf32>,
    %90 = vector.shape_cast %85 : vector<16x128xf32> to vector<1x16x128xf32>
    %c0_40 = arith.constant 0 : index
    %c8 = arith.constant 8 : index
    %c0_41 = arith.constant 0 : index
    %91 = vector.load %arg12[%c0_40, %c8, %c0_41] : memref<1x32x128xf32, #tpu.memory_space<vmem>>, vector<1x16x128xf32>
    tpu.vector_store %arg12[%c0_40, %c8, %c0_41], %90 {strides = array<i32>} : memref<1x32x128xf32, #tpu.memory_space<vmem>>, vector<1x16x128xf32>,
    %c0_42 = arith.constant 0 : index
    %c3_43 = arith.constant 3 : index
    %c0_44 = arith.constant 0 : index
    %92 = vector.load %arg12[%c0_42, %c3_43, %c0_44] : memref<1x32x128xf32, #tpu.memory_space<vmem>>, vector<1x16x128xf32>
    %c0_45 = arith.constant 0 : index
    %c0_46 = arith.constant 0 : index
    %93 = vector.load %arg8[%c0_45, %c0_46] : memref<11x128xf32, #tpu.memory_space<vmem>>, vector<1x128xf32>
    %94 = vector.shape_cast %93 : vector<1x128xf32> to vector<1x1x128xf32>
    %95 = vector.broadcast %94 : vector<1x1x128xf32> to vector<1x16x128xf32>
    %96 = arith.mulf %92, %95 : vector<1x16x128xf32>
    %c0_47 = arith.constant 0 : index
    %c4 = arith.constant 4 : index
    %c0_48 = arith.constant 0 : index
    %97 = vector.load %arg12[%c0_47, %c4, %c0_48] : memref<1x32x128xf32, #tpu.memory_space<vmem>>, vector<1x16x128xf32>
    %c1_49 = arith.constant 1 : index
    %c0_50 = arith.constant 0 : index
    %98 = vector.load %arg8[%c1_49, %c0_50] : memref<11x128xf32, #tpu.memory_space<vmem>>, vector<1x128xf32>
    %99 = vector.shape_cast %98 : vector<1x128xf32> to vector<1x1x128xf32>
    %100 = vector.broadcast %99 : vector<1x1x128xf32> to vector<1x16x128xf32>
    %101 = arith.mulf %97, %100 : vector<1x16x128xf32>
    %102 = arith.addf %96, %101 : vector<1x16x128xf32>
    %c0_51 = arith.constant 0 : index
    %c5 = arith.constant 5 : index
    %c0_52 = arith.constant 0 : index
    %103 = vector.load %arg12[%c0_51, %c5, %c0_52] : memref<1x32x128xf32, #tpu.memory_space<vmem>>, vector<1x16x128xf32>
    %c2_53 = arith.constant 2 : index
    %c0_54 = arith.constant 0 : index
    %104 = vector.load %arg8[%c2_53, %c0_54] : memref<11x128xf32, #tpu.memory_space<vmem>>, vector<1x128xf32>
    %105 = vector.shape_cast %104 : vector<1x128xf32> to vector<1x1x128xf32>
    %106 = vector.broadcast %105 : vector<1x1x128xf32> to vector<1x16x128xf32>
    %107 = arith.mulf %103, %106 : vector<1x16x128xf32>
    %108 = arith.addf %102, %107 : vector<1x16x128xf32>
    %c0_55 = arith.constant 0 : index
    %c6_56 = arith.constant 6 : index
    %c0_57 = arith.constant 0 : index
    %109 = vector.load %arg12[%c0_55, %c6_56, %c0_57] : memref<1x32x128xf32, #tpu.memory_space<vmem>>, vector<1x16x128xf32>
    %c3_58 = arith.constant 3 : index
    %c0_59 = arith.constant 0 : index
    %110 = vector.load %arg8[%c3_58, %c0_59] : memref<11x128xf32, #tpu.memory_space<vmem>>, vector<1x128xf32>
    %111 = vector.shape_cast %110 : vector<1x128xf32> to vector<1x1x128xf32>
    %112 = vector.broadcast %111 : vector<1x1x128xf32> to vector<1x16x128xf32>
    %113 = arith.mulf %109, %112 : vector<1x16x128xf32>
    %114 = arith.addf %108, %113 : vector<1x16x128xf32>
    %c0_60 = arith.constant 0 : index
    %c7 = arith.constant 7 : index
    %c0_61 = arith.constant 0 : index
    %115 = vector.load %arg12[%c0_60, %c7, %c0_61] : memref<1x32x128xf32, #tpu.memory_space<vmem>>, vector<1x16x128xf32>
    %c4_62 = arith.constant 4 : index
    %c0_63 = arith.constant 0 : index
    %116 = vector.load %arg8[%c4_62, %c0_63] : memref<11x128xf32, #tpu.memory_space<vmem>>, vector<1x128xf32>
    %117 = vector.shape_cast %116 : vector<1x128xf32> to vector<1x1x128xf32>
    %118 = vector.broadcast %117 : vector<1x1x128xf32> to vector<1x16x128xf32>
    %119 = arith.mulf %115, %118 : vector<1x16x128xf32>
    %120 = arith.addf %114, %119 : vector<1x16x128xf32>
    %c0_64 = arith.constant 0 : index
    %c8_65 = arith.constant 8 : index
    %c0_66 = arith.constant 0 : index
    %121 = vector.load %arg12[%c0_64, %c8_65, %c0_66] : memref<1x32x128xf32, #tpu.memory_space<vmem>>, vector<1x16x128xf32>
    %c5_67 = arith.constant 5 : index
    %c0_68 = arith.constant 0 : index
    %122 = vector.load %arg8[%c5_67, %c0_68] : memref<11x128xf32, #tpu.memory_space<vmem>>, vector<1x128xf32>
    %123 = vector.shape_cast %122 : vector<1x128xf32> to vector<1x1x128xf32>
    %124 = vector.broadcast %123 : vector<1x1x128xf32> to vector<1x16x128xf32>
    %125 = arith.mulf %121, %124 : vector<1x16x128xf32>
    %126 = arith.addf %120, %125 : vector<1x16x128xf32>
    %c0_69 = arith.constant 0 : index
    %c9 = arith.constant 9 : index
    %c0_70 = arith.constant 0 : index
    %127 = vector.load %arg12[%c0_69, %c9, %c0_70] : memref<1x32x128xf32, #tpu.memory_space<vmem>>, vector<1x16x128xf32>
    %c6_71 = arith.constant 6 : index
    %c0_72 = arith.constant 0 : index
    %128 = vector.load %arg8[%c6_71, %c0_72] : memref<11x128xf32, #tpu.memory_space<vmem>>, vector<1x128xf32>
    %129 = vector.shape_cast %128 : vector<1x128xf32> to vector<1x1x128xf32>
    %130 = vector.broadcast %129 : vector<1x1x128xf32> to vector<1x16x128xf32>
    %131 = arith.mulf %127, %130 : vector<1x16x128xf32>
    %132 = arith.addf %126, %131 : vector<1x16x128xf32>
    %c0_73 = arith.constant 0 : index
    %c10 = arith.constant 10 : index
    %c0_74 = arith.constant 0 : index
    %133 = vector.load %arg12[%c0_73, %c10, %c0_74] : memref<1x32x128xf32, #tpu.memory_space<vmem>>, vector<1x16x128xf32>
    %c7_75 = arith.constant 7 : index
    %c0_76 = arith.constant 0 : index
    %134 = vector.load %arg8[%c7_75, %c0_76] : memref<11x128xf32, #tpu.memory_space<vmem>>, vector<1x128xf32>
    %135 = vector.shape_cast %134 : vector<1x128xf32> to vector<1x1x128xf32>
    %136 = vector.broadcast %135 : vector<1x1x128xf32> to vector<1x16x128xf32>
    %137 = arith.mulf %133, %136 : vector<1x16x128xf32>
    %138 = arith.addf %132, %137 : vector<1x16x128xf32>
    %c0_77 = arith.constant 0 : index
    %c11 = arith.constant 11 : index
    %c0_78 = arith.constant 0 : index
    %139 = vector.load %arg12[%c0_77, %c11, %c0_78] : memref<1x32x128xf32, #tpu.memory_space<vmem>>, vector<1x16x128xf32>
    %c8_79 = arith.constant 8 : index
    %c0_80 = arith.constant 0 : index
    %140 = vector.load %arg8[%c8_79, %c0_80] : memref<11x128xf32, #tpu.memory_space<vmem>>, vector<1x128xf32>
    %141 = vector.shape_cast %140 : vector<1x128xf32> to vector<1x1x128xf32>
    %142 = vector.broadcast %141 : vector<1x1x128xf32> to vector<1x16x128xf32>
    %143 = arith.mulf %139, %142 : vector<1x16x128xf32>
    %144 = arith.addf %138, %143 : vector<1x16x128xf32>
    %c0_81 = arith.constant 0 : index
    %c12 = arith.constant 12 : index
    %c0_82 = arith.constant 0 : index
    %145 = vector.load %arg12[%c0_81, %c12, %c0_82] : memref<1x32x128xf32, #tpu.memory_space<vmem>>, vector<1x16x128xf32>
    %c9_83 = arith.constant 9 : index
    %c0_84 = arith.constant 0 : index
    %146 = vector.load %arg8[%c9_83, %c0_84] : memref<11x128xf32, #tpu.memory_space<vmem>>, vector<1x128xf32>
    %147 = vector.shape_cast %146 : vector<1x128xf32> to vector<1x1x128xf32>
    %148 = vector.broadcast %147 : vector<1x1x128xf32> to vector<1x16x128xf32>
    %149 = arith.mulf %145, %148 : vector<1x16x128xf32>
    %150 = arith.addf %144, %149 : vector<1x16x128xf32>
    %c0_85 = arith.constant 0 : index
    %c13 = arith.constant 13 : index
    %c0_86 = arith.constant 0 : index
    %151 = vector.load %arg12[%c0_85, %c13, %c0_86] : memref<1x32x128xf32, #tpu.memory_space<vmem>>, vector<1x16x128xf32>
    %c10_87 = arith.constant 10 : index
    %c0_88 = arith.constant 0 : index
    %152 = vector.load %arg8[%c10_87, %c0_88] : memref<11x128xf32, #tpu.memory_space<vmem>>, vector<1x128xf32>
    %153 = vector.shape_cast %152 : vector<1x128xf32> to vector<1x1x128xf32>
    %154 = vector.broadcast %153 : vector<1x1x128xf32> to vector<1x16x128xf32>
    %155 = arith.mulf %151, %154 : vector<1x16x128xf32>
    %156 = arith.addf %150, %155 : vector<1x16x128xf32>
    %157 = vector.shape_cast %156 : vector<1x16x128xf32> to vector<16x128xf32>
    %c0_89 = arith.constant 0 : index
    %c0_90 = arith.constant 0 : index
    %158 = vector.load %arg9[%c0_89, %c0_90] : memref<128x128xf32, #tpu.memory_space<vmem>>, vector<128x128xf32>
    %cst_91 = arith.constant dense<0.000000e+00> : vector<16x128xf32>
    %159 = tpu.matmul %157, %158, %cst_91 {dimension_numbers = #tpu.dot_dimension_numbers<[1], [0], [0], [1], [0, 0, 1, 1], [], []>} : vector<16x128xf32>, vector<128x128xf32>, vector<16x128xf32> -> vector<16x128xf32>
    %c0_92 = arith.constant 0 : index
    %c0_93 = arith.constant 0 : index
    %160 = vector.load %arg10[%c0_92, %c0_93] : memref<1x128xf32, #tpu.memory_space<vmem>>, vector<1x128xf32>
    %161 = vector.broadcast %160 : vector<1x128xf32> to vector<16x128xf32>
    %162 = arith.addf %159, %161 : vector<16x128xf32>
    %cst_94 = arith.constant 0.000000e+00 : f32
    %163 = vector.broadcast %cst_94 : f32 to vector<16x128xf32>
    %164 = arith.subf %163, %162 : vector<16x128xf32>
    %165 = math.exp %164 : vector<16x128xf32>
    %cst_95 = arith.constant 1.000000e+00 : f32
    %166 = vector.broadcast %cst_95 : f32 to vector<16x128xf32>
    %167 = arith.addf %166, %165 : vector<16x128xf32>
    %cst_96 = arith.constant 1.000000e+00 : f32
    %168 = vector.broadcast %cst_96 : f32 to vector<16x128xf32>
    %169 = arith.divf %168, %167 : vector<16x128xf32>
    %170 = arith.mulf %162, %169 : vector<16x128xf32>
    %cst_97 = arith.constant 0.000000e+00 : f32
    %171 = vector.broadcast %cst_97 : f32 to vector<16x128xf32>
    %172 = arith.subf %171, %170 : vector<16x128xf32>
    %173 = math.exp %172 : vector<16x128xf32>
    %cst_98 = arith.constant 1.000000e+00 : f32
    %174 = vector.broadcast %cst_98 : f32 to vector<16x128xf32>
    %175 = arith.addf %174, %173 : vector<16x128xf32>
    %cst_99 = arith.constant 1.000000e+00 : f32
    %176 = vector.broadcast %cst_99 : f32 to vector<16x128xf32>
    %177 = arith.divf %176, %175 : vector<16x128xf32>
    %c0_100 = arith.constant 0 : index
    %c0_101 = arith.constant 0 : index
    %178 = vector.load %arg11[%c0_100, %c0_101] : memref<16x128xf32, #tpu.memory_space<vmem>>, vector<16x128xf32>
    tpu.vector_store %arg11[%c0_100, %c0_101], %177 {strides = array<i32>} : memref<16x128xf32, #tpu.memory_space<vmem>>, vector<16x128xf32>,
    return
  }
  func.func @transform_0(%arg0: i32) -> (i32, i32, i32) {
    %c0_i32 = arith.constant 0 : i32
    %c0_i32_0 = arith.constant 0 : i32
    %c0_i32_1 = arith.constant 0 : i32
    return %arg0, %c0_i32, %c0_i32_0 : i32, i32, i32
  }
  func.func @transform_1(%arg0: i32) -> (i32, i32) {
    %c0_i32 = arith.constant 0 : i32
    %c0_i32_0 = arith.constant 0 : i32
    %c0_i32_1 = arith.constant 0 : i32
    return %c0_i32, %c0_i32_0 : i32, i32
  }
  func.func @transform_2(%arg0: i32) -> (i32, i32) {
    %c0_i32 = arith.constant 0 : i32
    %c0_i32_0 = arith.constant 0 : i32
    %c0_i32_1 = arith.constant 0 : i32
    return %c0_i32, %c0_i32_0 : i32, i32
  }
  func.func @transform_3(%arg0: i32) -> (i32, i32) {
    %c0_i32 = arith.constant 0 : i32
    %c0_i32_0 = arith.constant 0 : i32
    %c0_i32_1 = arith.constant 0 : i32
    return %c0_i32, %c0_i32_0 : i32, i32
  }
  func.func @transform_4(%arg0: i32) -> (i32, i32) {
    %c0_i32 = arith.constant 0 : i32
    %c0_i32_0 = arith.constant 0 : i32
    %c0_i32_1 = arith.constant 0 : i32
    return %c0_i32, %c0_i32_0 : i32, i32
  }
  func.func @transform_5(%arg0: i32) -> (i32, i32) {
    %c0_i32 = arith.constant 0 : i32
    %c0_i32_0 = arith.constant 0 : i32
    %c0_i32_1 = arith.constant 0 : i32
    return %c0_i32, %c0_i32_0 : i32, i32
  }
  func.func @transform_6(%arg0: i32) -> (i32, i32) {
    %c0_i32 = arith.constant 0 : i32
    %c0_i32_0 = arith.constant 0 : i32
    %c0_i32_1 = arith.constant 0 : i32
    return %c0_i32, %c0_i32_0 : i32, i32
  }
  func.func @transform_7(%arg0: i32) -> (i32, i32) {
    %c0_i32 = arith.constant 0 : i32
    %c0_i32_0 = arith.constant 0 : i32
    %c0_i32_1 = arith.constant 0 : i32
    return %c0_i32, %c0_i32_0 : i32, i32
  }
  func.func @transform_8(%arg0: i32) -> (i32, i32) {
    %c0_i32 = arith.constant 0 : i32
    %c0_i32_0 = arith.constant 0 : i32
    %c0_i32_1 = arith.constant 0 : i32
    return %c0_i32, %c0_i32_0 : i32, i32
  }
  func.func @transform_9(%arg0: i32) -> (i32, i32) {
    %c0_i32 = arith.constant 0 : i32
    %c0_i32_0 = arith.constant 0 : i32
    %c0_i32_1 = arith.constant 0 : i32
    return %c0_i32, %c0_i32_0 : i32, i32
  }
  func.func @transform_10(%arg0: i32) -> (i32, i32) {
    %c0_i32 = arith.constant 0 : i32
    %c0_i32_0 = arith.constant 0 : i32
    return %arg0, %c0_i32 : i32, i32
  }
}

</mosaic_0001>

<llo_original>
// kernel: caa_forward.1
$region0: #{caa_forward.1}
  #allocation0 [shape = 'u32[]', space=smem, size = 0x4, offset = 0x4, fixed_abs, tag = 'smem constant byte address 0x4 - core index']
  #allocation1 [shape = 'u32[144,128]{1,0:T(1,128)}', space=vmem, size = 0x12000, scoped, tag = 'internal scratch']
  #allocation2 [shape = 'f32[1,32,128]{2,1,0:T(8,128)}', space=vmem, size = 0x4000, scoped, tag = 'scratch operand']
  %s0 = inlined_call_operand.vmem [shape: f32[1,22,128], index: 0, kind: input, shape index: {}]
  %s1 = inlined_call_operand.vmem [shape: f32[4,128], index: 1, kind: input, shape index: {}]
  %s2 = inlined_call_operand.vmem [shape: f32[128,128], index: 2, kind: input, shape index: {}]
  %s3 = inlined_call_operand.vmem [shape: f32[128,128], index: 3, kind: input, shape index: {}]
  %s4 = inlined_call_operand.vmem [shape: f32[1,128], index: 4, kind: input, shape index: {}]
  %s5 = inlined_call_operand.vmem [shape: f32[128,128], index: 5, kind: input, shape index: {}]
  %s6 = inlined_call_operand.vmem [shape: f32[1,128], index: 6, kind: input, shape index: {}]
  %s7 = inlined_call_operand.vmem [shape: f32[11,128], index: 7, kind: input, shape index: {}]
  %s8 = inlined_call_operand.vmem [shape: f32[128,128], index: 8, kind: input, shape index: {}]
  %s9 = inlined_call_operand.vmem [shape: f32[1,128], index: 9, kind: input, shape index: {}]
  %s10 = inlined_call_operand.vmem [shape: f32[16,128], index: 10, kind: output, shape index: {}]
  %s11 = sld [smem:[#allocation0]]
  $region50: #{caa_forward.1} parent=0
    _
  %s13 = ssub.s32 1, %s11
  %s14 = scalar_select 0, %s13, %s11
  // Predicated region
  $region2: #{caa_forward.1} parent=0 // pred_check
    _
  $region3: #{caa_forward.1} parent=0 // pred_check_branch
    %16 = sbr.rel (0) target = $region5
  $region4: #{caa_forward.1} parent=0 // pred_region
    _
  $region5: #{caa_forward.1} parent=0 // pred_fallthru
    _
  // Predicated region
  $region6: #{caa_forward.1} parent=0 // pred_check
    _
  $region7: #{caa_forward.1} parent=0 // pred_check_branch
    %18 = sbr.rel (0) target = $region9
  $region8: #{caa_forward.1} parent=0 // pred_region
    _
  $region9: #{caa_forward.1} parent=0 // pred_fallthru
    _
  // Predicated region
  $region10: #{caa_forward.1} parent=0 // pred_check
    _
  $region11: #{caa_forward.1} parent=0 // pred_check_branch
    %20 = sbr.rel (0) target = $region13
  $region12: #{caa_forward.1} parent=0 // pred_region
    _
  $region13: #{caa_forward.1} parent=0 // pred_fallthru
    _
  // Predicated region
  $region14: #{caa_forward.1} parent=0 // pred_check
    _
  $region15: #{caa_forward.1} parent=0 // pred_check_branch
    %22 = sbr.rel (0) target = $region17
  $region16: #{caa_forward.1} parent=0 // pred_region
    _
  $region17: #{caa_forward.1} parent=0 // pred_fallthru
    _
  // Predicated region
  $region18: #{caa_forward.1} parent=0 // pred_check
    _
  $region19: #{caa_forward.1} parent=0 // pred_check_branch
    %24 = sbr.rel (0) target = $region21
  $region20: #{caa_forward.1} parent=0 // pred_region
    _
  $region21: #{caa_forward.1} parent=0 // pred_fallthru
    _
  // Predicated region
  $region22: #{caa_forward.1} parent=0 // pred_check
    _
  $region23: #{caa_forward.1} parent=0 // pred_check_branch
    %26 = sbr.rel (0) target = $region25
  $region24: #{caa_forward.1} parent=0 // pred_region
    _
  $region25: #{caa_forward.1} parent=0 // pred_fallthru
    _
  // Predicated region
  $region26: #{caa_forward.1} parent=0 // pred_check
    _
  $region27: #{caa_forward.1} parent=0 // pred_check_branch
    %28 = sbr.rel (0) target = $region29
  $region28: #{caa_forward.1} parent=0 // pred_region
    _
  $region29: #{caa_forward.1} parent=0 // pred_fallthru
    _
  // Predicated region
  $region30: #{caa_forward.1} parent=0 // pred_check
    _
  $region31: #{caa_forward.1} parent=0 // pred_check_branch
    %30 = sbr.rel (0) target = $region33
  $region32: #{caa_forward.1} parent=0 // pred_region
    _
  $region33: #{caa_forward.1} parent=0 // pred_fallthru
    _
  // Predicated region
  $region34: #{caa_forward.1} parent=0 // pred_check
    _
  $region35: #{caa_forward.1} parent=0 // pred_check_branch
    %32 = sbr.rel (0) target = $region37
  $region36: #{caa_forward.1} parent=0 // pred_region
    _
  $region37: #{caa_forward.1} parent=0 // pred_fallthru
    _
  // Predicated region
  $region38: #{caa_forward.1} parent=0 // pred_check
    _
  $region39: #{caa_forward.1} parent=0 // pred_check_branch
    %34 = sbr.rel (0) target = $region41
  $region40: #{caa_forward.1} parent=0 // pred_region
    _
  $region41: #{caa_forward.1} parent=0 // pred_fallthru
    _
  %v35 = vld [vmem:[%s0] sm:$0xff]
  %v36 = vld [vmem:[%s0 + $0x8] sm:$0xff]
  %v37 = vld [vmem:[%s0 + $0x10] sm:$0x1f]
  %v38 = vld [vmem:[%s0 + $0x1] sm:$0xff]
  %v39 = vld [vmem:[%s0 + $0x9] sm:$0xff]
  %v40 = vld [vmem:[%s0 + $0x11] sm:$0x1f]
  %v41 = vlaneseq
  %v42 = vshrl.u32 %v41, 7
  %v43 = vadd.s32 %v42, 8
  %v44 = vadd.s32 %v42, 16
  %v45 = vadd.f32 %v35, %v38
  %v46 = vadd.f32 %v36, %v39
  %v47 = vadd.f32 %v37, %v40
  %vm48 = vcmp.ge.s32.totalorder %v42, 3
  %vm49 = vcmp.ge.s32.totalorder %v43, 3
  %vm50 = vcmp.ge.s32.totalorder %v44, 3
  %vm51 = vcmp.lt.s32.totalorder %v42, 19
  %vm52 = vcmp.lt.s32.totalorder %v43, 19
  %vm53 = vcmp.lt.s32.totalorder %v44, 19
  %vm54 = vmand %vm48, %vm51
  %vm55 = vmand %vm49, %vm52
  %vm56 = vmand %vm50, %vm53
  %v57 = vsel %vm54, 0.0, -3e+38
  %v58 = vsel %vm55, 0.0, -3e+38
  %v59 = vsel %vm56, 0.0, -3e+38
  %v60 = vadd.f32 %v35, %v57
  %v61 = vadd.f32 %v36, %v58
  %v62 = vadd.f32 %v37, %v59
  %v63 = vadd.s32 %v42, 1
  %v64 = vadd.s32 %v43, 1
  %v65 = vadd.s32 %v44, 1
  %vm66 = vcmp.ge.s32.totalorder %v63, 3
  %vm67 = vcmp.ge.s32.totalorder %v64, 3
  %vm68 = vcmp.ge.s32.totalorder %v65, 3
  %vm69 = vcmp.lt.s32.totalorder %v63, 19
  %vm70 = vcmp.lt.s32.totalorder %v64, 19
  %vm71 = vcmp.lt.s32.totalorder %v65, 19
  %vm72 = vmand %vm66, %vm69
  %vm73 = vmand %vm67, %vm70
  %vm74 = vmand %vm68, %vm71
  %v75 = vsel %vm72, 0.0, -3e+38
  %v76 = vsel %vm73, 0.0, -3e+38
  %v77 = vsel %vm74, 0.0, -3e+38
  %v78 = vadd.f32 %v38, %v75
  %v79 = vadd.f32 %v39, %v76
  %v80 = vadd.f32 %v40, %v77
  %v81 = vmax.f32 %v60, %v78
  %v82 = vmax.f32 %v61, %v79
  %v83 = vmax.f32 %v62, %v80
  %vm87 = vcmask 1045504
  %v88 = vrot.slane %v45, 2
  %v89 = vrot.slane %v46, 2
  %v90 = vsel %vm87, %v88, %v89
  %v91 = vrot.slane %v47, 2
  %v92 = vsel %vm87, %v89, %v91
  %v95 = vadd.f32 %v45, %v90
  %v96 = vadd.f32 %v46, %v92
  %v100 = vrot.slane %v81, 2
  %v101 = vrot.slane %v82, 2
  %v102 = vsel %vm87, %v100, %v101
  %v103 = vrot.slane %v83, 2
  %v104 = vsel %vm87, %v101, %v103
  %v108 = vmax.f32 %v81, %v102
  %v109 = vmax.f32 %v82, %v104
  %v110 = vmax.f32 %v83, %v103
  %vm111 = vcmask 1043456
  %v112 = vrot.slane %v45, 4
  %v113 = vrot.slane %v46, 4
  %v114 = vsel %vm111, %v112, %v113
  %v115 = vrot.slane %v47, 4
  %v116 = vsel %vm111, %v113, %v115
  %v119 = vadd.f32 %v95, %v114
  %v120 = vadd.f32 %v96, %v116
  %v121 = vld [vmem:[%s0 + $0x6] sm:$0xff]
  %v122 = vld [vmem:[%s0 + $0xe] sm:$0xff]
  %v123 = vadd.f32 %v119, %v121
  %v124 = vadd.f32 %v120, %v122
  %vm128 = vcmask 1044480
  %v129 = vrot.slane %v108, 3
  %v130 = vrot.slane %v109, 3
  %v131 = vsel %vm128, %v129, %v130
  %v132 = vrot.slane %v110, 3
  %v133 = vsel %vm128, %v130, %v132
  %v136 = vmax.f32 %v108, %v131
  %v137 = vmax.f32 %v109, %v133
  %138 = vrot.lane.b32.xlu0 %v136, 124
  %v139 = vpop.permute.xlu0 %138
  %140 = vrot.lane.b32.xlu0 %v137, 124
  %v141 = vpop.permute.xlu0 %140
  %v142 = vld [vmem:[%s1] sm:$0x1]
  %v143 = vlaneseq
  %v144 = vshrl.u32 %v143, 7
  %v145 = vsub.s32 0, %v144
  %v146 = vrot.slane %v142, %v145
  %v147 = vadd.f32 %v139, %v146
  %v148 = vadd.f32 %v141, %v146
  %149 = vrot.lane.b32.xlu0 %v136, 4
  %v150 = vpop.permute.xlu0 %149
  %151 = vrot.lane.b32.xlu0 %v137, 4
  %v152 = vpop.permute.xlu0 %151
  %v153 = vld [vmem:[%s1 + $0x1] sm:$0x1]
  %v154 = vlaneseq
  %v155 = vshrl.u32 %v154, 7
  %v156 = vsub.s32 0, %v155
  %v157 = vrot.slane %v153, %v156
  %v158 = vadd.f32 %v150, %v157
  %v159 = vadd.f32 %v152, %v157
  %v160 = vmax.f32 %v147, %v158
  %v161 = vmax.f32 %v148, %v159
  %v162 = vmax.f32 %v136, %v160
  %v163 = vmax.f32 %v137, %v161
  %164 = vrot.lane.b32.xlu0 %v162, 120
  %v165 = vpop.permute.xlu0 %164
  %166 = vrot.lane.b32.xlu0 %v163, 120
  %v167 = vpop.permute.xlu0 %166
  %v168 = vld [vmem:[%s1 + $0x2] sm:$0x1]
  %v169 = vlaneseq
  %v170 = vshrl.u32 %v169, 7
  %v171 = vsub.s32 0, %v170
  %v172 = vrot.slane %v168, %v171
  %v173 = vadd.f32 %v165, %v172
  %v174 = vadd.f32 %v167, %v172
  %175 = vrot.lane.b32.xlu0 %v162, 8
  %v176 = vpop.permute.xlu0 %175
  %177 = vrot.lane.b32.xlu0 %v163, 8
  %v178 = vpop.permute.xlu0 %177
  %v179 = vld [vmem:[%s1 + $0x3] sm:$0x1]
  %v180 = vlaneseq
  %v181 = vshrl.u32 %v180, 7
  %v182 = vsub.s32 0, %v181
  %v183 = vrot.slane %v179, %v182
  %v184 = vadd.f32 %v176, %v183
  %v185 = vadd.f32 %v178, %v183
  %v186 = vmax.f32 %v173, %v184
  %v187 = vmax.f32 %v174, %v185
  %v188 = vmax.f32 %v162, %v186
  %v189 = vmax.f32 %v163, %v187
  %v190 = vld [vmem:[%s2] sm:$0xff]
  %v191 = vld [vmem:[%s2 + $0x8] sm:$0xff]
  %v192 = vld [vmem:[%s2 + $0x10] sm:$0xff]
  %v193 = vld [vmem:[%s2 + $0x18] sm:$0xff]
  %v194 = vld [vmem:[%s2 + $0x20] sm:$0xff]
  %v195 = vld [vmem:[%s2 + $0x28] sm:$0xff]
  %v196 = vld [vmem:[%s2 + $0x30] sm:$0xff]
  %v197 = vld [vmem:[%s2 + $0x38] sm:$0xff]
  %v198 = vld [vmem:[%s2 + $0x40] sm:$0xff]
  %v199 = vld [vmem:[%s2 + $0x48] sm:$0xff]
  %v200 = vld [vmem:[%s2 + $0x50] sm:$0xff]
  %v201 = vld [vmem:[%s2 + $0x58] sm:$0xff]
  %v202 = vld [vmem:[%s2 + $0x60] sm:$0xff]
  %v203 = vld [vmem:[%s2 + $0x68] sm:$0xff]
  %v204 = vld [vmem:[%s2 + $0x70] sm:$0xff]
  %v205 = vld [vmem:[%s2 + $0x78] sm:$0xff]
  %v206 = vld [vmem:[%s3] sm:$0xff]
  %v207 = vld [vmem:[%s3 + $0x8] sm:$0xff]
  %v208 = vld [vmem:[%s3 + $0x10] sm:$0xff]
  %v209 = vld [vmem:[%s3 + $0x18] sm:$0xff]
  %v210 = vld [vmem:[%s3 + $0x20] sm:$0xff]
  %v211 = vld [vmem:[%s3 + $0x28] sm:$0xff]
  %v212 = vld [vmem:[%s3 + $0x30] sm:$0xff]
  %v213 = vld [vmem:[%s3 + $0x38] sm:$0xff]
  %v214 = vld [vmem:[%s3 + $0x40] sm:$0xff]
  %v215 = vld [vmem:[%s3 + $0x48] sm:$0xff]
  %v216 = vld [vmem:[%s3 + $0x50] sm:$0xff]
  %v217 = vld [vmem:[%s3 + $0x58] sm:$0xff]
  %v218 = vld [vmem:[%s3 + $0x60] sm:$0xff]
  %v219 = vld [vmem:[%s3 + $0x68] sm:$0xff]
  %v220 = vld [vmem:[%s3 + $0x70] sm:$0xff]
  %v221 = vld [vmem:[%s3 + $0x78] sm:$0xff]
  %222 = vmatprep.subr.mxu0 0.0
  %223 = vmatpush1.msra.mxu0 %v206
  %224 = vmatprep.subr.mxu0 0.0
  %225 = vmatpush1.msra.mxu0 %v207
  %226 = vmatprep.subr.mxu0 0.0
  %227 = vmatpush1.msra.mxu0 %v208
  %228 = vmatprep.subr.mxu0 0.0
  %229 = vmatpush1.msra.mxu0 %v209
  %230 = vmatprep.subr.mxu0 0.0
  %231 = vmatpush1.msra.mxu0 %v210
  %232 = vmatprep.subr.mxu0 0.0
  %233 = vmatpush1.msra.mxu0 %v211
  %234 = vmatprep.subr.mxu0 0.0
  %235 = vmatpush1.msra.mxu0 %v212
  %236 = vmatprep.subr.mxu0 0.0
  %237 = vmatpush1.msra.mxu0 %v213
  %238 = vmatprep.subr.mxu0 0.0
  %239 = vmatpush1.msra.mxu0 %v214
  %240 = vmatprep.subr.mxu0 0.0
  %241 = vmatpush1.msra.mxu0 %v215
  %242 = vmatprep.subr.mxu0 0.0
  %243 = vmatpush1.msra.mxu0 %v216
  %244 = vmatprep.subr.mxu0 0.0
  %245 = vmatpush1.msra.mxu0 %v217
  %246 = vmatprep.subr.mxu0 0.0
  %247 = vmatpush1.msra.mxu0 %v218
  %248 = vmatprep.subr.mxu0 0.0
  %249 = vmatpush1.msra.mxu0 %v219
  %250 = vmatprep.subr.mxu0 0.0
  %251 = vmatpush1.msra.mxu0 %v220
  %252 = vmatprep.subr.mxu0 0.0
  %253 = vmatpush1.msra.mxu0 %v221
  %254 = vmatprep.subr.mxu0 0.0
  %255 = vmatpush1.msra.mxu0 0.0
  %256 = vmatprep.subr.mxu0 0.0
  %257 = vmatpush1.msra.mxu0 0.0
  %258 = vmatprep.subr.mxu0 0.0
  %259 = vmatpush1.msra.mxu0 0.0
  %260 = vmatprep.subr.mxu0 0.0
  %261 = vmatpush1.msra.mxu0 0.0
  %262 = vmatprep.subr.mxu0 0.0
  %263 = vmatpush1.msra.mxu0 0.0
  %264 = vmatprep.subr.mxu0 0.0
  %265 = vmatpush1.msra.mxu0 0.0
  %266 = vmatprep.subr.mxu0 0.0
  %267 = vmatpush1.msra.mxu0 0.0
  %268 = vmatprep.subr.mxu0 0.0
  %269 = vmatpush1.msra.mxu0 0.0
  %270 = vmatprep.subr.mxu0 0.0
  %271 = vmatpush1.msra.mxu0 0.0
  %272 = vmatprep.subr.mxu0 0.0
  %273 = vmatpush1.msra.mxu0 0.0
  %274 = vmatprep.subr.mxu0 0.0
  %275 = vmatpush1.msra.mxu0 0.0
  %276 = vmatprep.subr.mxu0 0.0
  %277 = vmatpush1.msra.mxu0 0.0
  %278 = vmatprep.subr.mxu0 0.0
  %279 = vmatpush1.msra.mxu0 0.0
  %280 = vmatprep.subr.mxu0 0.0
  %281 = vmatpush1.msra.mxu0 0.0
  %282 = vmatprep.subr.mxu0 0.0
  %283 = vmatpush1.msra.mxu0 0.0
  %284 = vmatprep.subr.mxu0 0.0
  %285 = vmatpush1.msra.mxu0 0.0
  %286 = vmatprep.mubr.f32.mxu0 0.0
  %287 = vmatmul.mubr.f32.gmra.mrb[0].mxu0 %v188
  %v288 = vpop.f32.mrb[0].mxu0
  %v289 = vadd.f32 0.0, %v288
  %v290 = vpop.f32.mrb[0].mxu0
  %291 = vmatprep.mubr.f32.mxu0 0.0
  %292 = vmatmul.mubr.f32.gmra.mrb[0].mxu0 %v189
  %v293 = vpop.f32.mrb[0].mxu0
  %v294 = vadd.f32 0.0, %v293
  %v295 = vpop.f32.mrb[0].mxu0
  %296 = vdwg.mxu0
  %297 = vmatprep.subr.mxu0 0.0
  %298 = vmatpush1.msra.mxu0 %v190
  %299 = vmatprep.subr.mxu0 0.0
  %300 = vmatpush1.msra.mxu0 %v191
  %301 = vmatprep.subr.mxu0 0.0
  %302 = vmatpush1.msra.mxu0 %v192
  %303 = vmatprep.subr.mxu0 0.0
  %304 = vmatpush1.msra.mxu0 %v193
  %305 = vmatprep.subr.mxu0 0.0
  %306 = vmatpush1.msra.mxu0 %v194
  %307 = vmatprep.subr.mxu0 0.0
  %308 = vmatpush1.msra.mxu0 %v195
  %309 = vmatprep.subr.mxu0 0.0
  %310 = vmatpush1.msra.mxu0 %v196
  %311 = vmatprep.subr.mxu0 0.0
  %312 = vmatpush1.msra.mxu0 %v197
  %313 = vmatprep.subr.mxu0 0.0
  %314 = vmatpush1.msra.mxu0 %v198
  %315 = vmatprep.subr.mxu0 0.0
  %316 = vmatpush1.msra.mxu0 %v199
  %317 = vmatprep.subr.mxu0 0.0
  %318 = vmatpush1.msra.mxu0 %v200
  %319 = vmatprep.subr.mxu0 0.0
  %320 = vmatpush1.msra.mxu0 %v201
  %321 = vmatprep.subr.mxu0 0.0
  %322 = vmatpush1.msra.mxu0 %v202
  %323 = vmatprep.subr.mxu0 0.0
  %324 = vmatpush1.msra.mxu0 %v203
  %325 = vmatprep.subr.mxu0 0.0
  %326 = vmatpush1.msra.mxu0 %v204
  %327 = vmatprep.subr.mxu0 0.0
  %328 = vmatpush1.msra.mxu0 %v205
  %329 = vmatprep.subr.mxu0 0.0
  %330 = vmatpush1.msra.mxu0 0.0
  %331 = vmatprep.subr.mxu0 0.0
  %332 = vmatpush1.msra.mxu0 0.0
  %333 = vmatprep.subr.mxu0 0.0
  %334 = vmatpush1.msra.mxu0 0.0
  %335 = vmatprep.subr.mxu0 0.0
  %336 = vmatpush1.msra.mxu0 0.0
  %337 = vmatprep.subr.mxu0 0.0
  %338 = vmatpush1.msra.mxu0 0.0
  %339 = vmatprep.subr.mxu0 0.0
  %340 = vmatpush1.msra.mxu0 0.0
  %341 = vmatprep.subr.mxu0 0.0
  %342 = vmatpush1.msra.mxu0 0.0
  %343 = vmatprep.subr.mxu0 0.0
  %344 = vmatpush1.msra.mxu0 0.0
  %345 = vmatprep.subr.mxu0 0.0
  %346 = vmatpush1.msra.mxu0 0.0
  %347 = vmatprep.subr.mxu0 0.0
  %348 = vmatpush1.msra.mxu0 0.0
  %349 = vmatprep.subr.mxu0 0.0
  %350 = vmatpush1.msra.mxu0 0.0
  %351 = vmatprep.subr.mxu0 0.0
  %352 = vmatpush1.msra.mxu0 0.0
  %353 = vmatprep.subr.mxu0 0.0
  %354 = vmatpush1.msra.mxu0 0.0
  %355 = vmatprep.subr.mxu0 0.0
  %356 = vmatpush1.msra.mxu0 0.0
  %357 = vmatprep.subr.mxu0 0.0
  %358 = vmatpush1.msra.mxu0 0.0
  %359 = vmatprep.subr.mxu0 0.0
  %360 = vmatpush1.msra.mxu0 0.0
  %361 = vmatprep.mubr.f32.mxu0 0.0
  %362 = vmatmul.mubr.f32.gmra.mrb[0].mxu0 %v123
  %v363 = vpop.f32.mrb[0].mxu0
  %v364 = vadd.f32 %v289, %v363
  %v365 = vpop.f32.mrb[0].mxu0
  %366 = vmatprep.mubr.f32.mxu0 0.0
  %367 = vmatmul.mubr.f32.gmra.mrb[0].mxu0 %v124
  %v368 = vpop.f32.mrb[0].mxu0
  %v369 = vadd.f32 %v294, %v368
  %v370 = vpop.f32.mrb[0].mxu0
  %371 = vdwg.mxu0
  %v372 = vld [vmem:[%s4] sm:$0x1]
  %v374 = vlaneseq
  %v375 = vshrl.u32 %v374, 7
  %v376 = vsub.s32 0, %v375
  %v377 = vrot.slane %v372, %v376
  %v379 = vadd.f32 %v364, %v377
  %v380 = vadd.f32 %v369, %v377
  %v381 = vsub.f32 0.0, %v379
  %v382 = vsub.f32 0.0, %v380
  %v383 = vmul.f32 %v381, 1.442695
  %v384 = vpow.pop %v383
  %v385 = vmul.f32 %v382, 1.442695
  %v386 = vpow.pop %v385
  %v387 = vadd.f32 %v384, 1.0
  %v388 = vadd.f32 %v386, 1.0
  %v389 = vrcp.pop %v387
  %v390 = vmul.f32 1.0, %v389
  %v391 = vrcp.pop %v388
  %v392 = vmul.f32 1.0, %v391
  %v393 = vmul.f32 %v379, %v390
  %v394 = vmul.f32 %v380, %v392
  %v395 = vld [vmem:[%s5] sm:$0xff]
  %v396 = vld [vmem:[%s5 + $0x8] sm:$0xff]
  %v397 = vld [vmem:[%s5 + $0x10] sm:$0xff]
  %v398 = vld [vmem:[%s5 + $0x18] sm:$0xff]
  %v399 = vld [vmem:[%s5 + $0x20] sm:$0xff]
  %v400 = vld [vmem:[%s5 + $0x28] sm:$0xff]
  %v401 = vld [vmem:[%s5 + $0x30] sm:$0xff]
  %v402 = vld [vmem:[%s5 + $0x38] sm:$0xff]
  %v403 = vld [vmem:[%s5 + $0x40] sm:$0xff]
  %v404 = vld [vmem:[%s5 + $0x48] sm:$0xff]
  %v405 = vld [vmem:[%s5 + $0x50] sm:$0xff]
  %v406 = vld [vmem:[%s5 + $0x58] sm:$0xff]
  %v407 = vld [vmem:[%s5 + $0x60] sm:$0xff]
  %v408 = vld [vmem:[%s5 + $0x68] sm:$0xff]
  %v409 = vld [vmem:[%s5 + $0x70] sm:$0xff]
  %v410 = vld [vmem:[%s5 + $0x78] sm:$0xff]
  %v411 = vld [vmem:[%s6] sm:$0x1]
  %v413 = vlaneseq
  %v414 = vshrl.u32 %v413, 7
  %v415 = vsub.s32 0, %v414
  %v416 = vrot.slane %v411, %v415
  %418 = vmatprep.subr.mxu0 0.0
  %419 = vmatpush1.msra.mxu0 %v395
  %420 = vmatprep.subr.mxu0 0.0
  %421 = vmatpush1.msra.mxu0 %v396
  %422 = vmatprep.subr.mxu0 0.0
  %423 = vmatpush1.msra.mxu0 %v397
  %424 = vmatprep.subr.mxu0 0.0
  %425 = vmatpush1.msra.mxu0 %v398
  %426 = vmatprep.subr.mxu0 0.0
  %427 = vmatpush1.msra.mxu0 %v399
  %428 = vmatprep.subr.mxu0 0.0
  %429 = vmatpush1.msra.mxu0 %v400
  %430 = vmatprep.subr.mxu0 0.0
  %431 = vmatpush1.msra.mxu0 %v401
  %432 = vmatprep.subr.mxu0 0.0
  %433 = vmatpush1.msra.mxu0 %v402
  %434 = vmatprep.subr.mxu0 0.0
  %435 = vmatpush1.msra.mxu0 %v403
  %436 = vmatprep.subr.mxu0 0.0
  %437 = vmatpush1.msra.mxu0 %v404
  %438 = vmatprep.subr.mxu0 0.0
  %439 = vmatpush1.msra.mxu0 %v405
  %440 = vmatprep.subr.mxu0 0.0
  %441 = vmatpush1.msra.mxu0 %v406
  %442 = vmatprep.subr.mxu0 0.0
  %443 = vmatpush1.msra.mxu0 %v407
  %444 = vmatprep.subr.mxu0 0.0
  %445 = vmatpush1.msra.mxu0 %v408
  %446 = vmatprep.subr.mxu0 0.0
  %447 = vmatpush1.msra.mxu0 %v409
  %448 = vmatprep.subr.mxu0 0.0
  %449 = vmatpush1.msra.mxu0 %v410
  %450 = vmatprep.subr.mxu0 0.0
  %451 = vmatpush1.msra.mxu0 0.0
  %452 = vmatprep.subr.mxu0 0.0
  %453 = vmatpush1.msra.mxu0 0.0
  %454 = vmatprep.subr.mxu0 0.0
  %455 = vmatpush1.msra.mxu0 0.0
  %456 = vmatprep.subr.mxu0 0.0
  %457 = vmatpush1.msra.mxu0 0.0
  %458 = vmatprep.subr.mxu0 0.0
  %459 = vmatpush1.msra.mxu0 0.0
  %460 = vmatprep.subr.mxu0 0.0
  %461 = vmatpush1.msra.mxu0 0.0
  %462 = vmatprep.subr.mxu0 0.0
  %463 = vmatpush1.msra.mxu0 0.0
  %464 = vmatprep.subr.mxu0 0.0
  %465 = vmatpush1.msra.mxu0 0.0
  %466 = vmatprep.subr.mxu0 0.0
  %467 = vmatpush1.msra.mxu0 0.0
  %468 = vmatprep.subr.mxu0 0.0
  %469 = vmatpush1.msra.mxu0 0.0
  %470 = vmatprep.subr.mxu0 0.0
  %471 = vmatpush1.msra.mxu0 0.0
  %472 = vmatprep.subr.mxu0 0.0
  %473 = vmatpush1.msra.mxu0 0.0
  %474 = vmatprep.subr.mxu0 0.0
  %475 = vmatpush1.msra.mxu0 0.0
  %476 = vmatprep.subr.mxu0 0.0
  %477 = vmatpush1.msra.mxu0 0.0
  %478 = vmatprep.subr.mxu0 0.0
  %479 = vmatpush1.msra.mxu0 0.0
  %480 = vmatprep.subr.mxu0 0.0
  %481 = vmatpush1.msra.mxu0 0.0
  %482 = vmatprep.mubr.f32.mxu0 0.0
  %483 = vmatmul.mubr.f32.gmra.mrb[0].mxu0 %v393
  %v484 = vpop.f32.mrb[0].mxu0
  %v485 = vadd.f32 %v416, %v484
  %v486 = vpop.f32.mrb[0].mxu0
  %487 = vmatprep.mubr.f32.mxu0 0.0
  %488 = vmatmul.mubr.f32.gmra.mrb[0].mxu0 %v394
  %v489 = vpop.f32.mrb[0].mxu0
  %v490 = vadd.f32 %v416, %v489
  %v491 = vpop.f32.mrb[0].mxu0
  %492 = vdwg.mxu0
  %493 = vst [vmem:[#allocation2] sm:$0xff] 0.0
  %494 = vst [vmem:[#allocation2 + $0x18] sm:$0xff] 0.0
  %495 = vst [vmem:[#allocation2 + $0x8] sm:$0xff] %v485
  %496 = vst [vmem:[#allocation2 + $0x10] sm:$0xff] %v490
  %v497 = vld [vmem:[#allocation2 + $0x3] sm:$0xff]
  %v498 = vld [vmem:[#allocation2 + $0xb] sm:$0xff]
  %v499 = vld [vmem:[%s7] sm:$0x1]
  %v500 = vlaneseq
  %v501 = vshrl.u32 %v500, 7
  %v502 = vsub.s32 0, %v501
  %v503 = vrot.slane %v499, %v502
  %v504 = vmul.f32 %v497, %v503
  %v505 = vmul.f32 %v498, %v503
  %v506 = vld [vmem:[#allocation2 + $0x4] sm:$0xff]
  %v507 = vld [vmem:[#allocation2 + $0xc] sm:$0xff]
  %v508 = vld [vmem:[%s7 + $0x1] sm:$0x1]
  %v509 = vlaneseq
  %v510 = vshrl.u32 %v509, 7
  %v511 = vsub.s32 0, %v510
  %v512 = vrot.slane %v508, %v511
  %v513 = vmul.f32 %v506, %v512
  %v514 = vmul.f32 %v507, %v512
  %v515 = vadd.f32 %v504, %v513
  %v516 = vadd.f32 %v505, %v514
  %v517 = vld [vmem:[#allocation2 + $0x5] sm:$0xff]
  %v518 = vld [vmem:[#allocation2 + $0xd] sm:$0xff]
  %v519 = vld [vmem:[%s7 + $0x2] sm:$0x1]
  %v520 = vlaneseq
  %v521 = vshrl.u32 %v520, 7
  %v522 = vsub.s32 0, %v521
  %v523 = vrot.slane %v519, %v522
  %v524 = vmul.f32 %v517, %v523
  %v525 = vmul.f32 %v518, %v523
  %v526 = vadd.f32 %v515, %v524
  %v527 = vadd.f32 %v516, %v525
  %v528 = vld [vmem:[#allocation2 + $0x6] sm:$0xff]
  %v529 = vld [vmem:[#allocation2 + $0xe] sm:$0xff]
  %v530 = vld [vmem:[%s7 + $0x3] sm:$0x1]
  %v531 = vlaneseq
  %v532 = vshrl.u32 %v531, 7
  %v533 = vsub.s32 0, %v532
  %v534 = vrot.slane %v530, %v533
  %v535 = vmul.f32 %v528, %v534
  %v536 = vmul.f32 %v529, %v534
  %v537 = vadd.f32 %v526, %v535
  %v538 = vadd.f32 %v527, %v536
  %v539 = vld [vmem:[#allocation2 + $0x7] sm:$0xff]
  %v540 = vld [vmem:[#allocation2 + $0xf] sm:$0xff]
  %v541 = vld [vmem:[%s7 + $0x4] sm:$0x1]
  %v542 = vlaneseq
  %v543 = vshrl.u32 %v542, 7
  %v544 = vsub.s32 0, %v543
  %v545 = vrot.slane %v541, %v544
  %v546 = vmul.f32 %v539, %v545
  %v547 = vmul.f32 %v540, %v545
  %v548 = vadd.f32 %v537, %v546
  %v549 = vadd.f32 %v538, %v547
  %v550 = vld [vmem:[#allocation2 + $0x8] sm:$0xff]
  %v551 = vld [vmem:[#allocation2 + $0x10] sm:$0xff]
  %v552 = vld [vmem:[%s7 + $0x5] sm:$0x1]
  %v553 = vlaneseq
  %v554 = vshrl.u32 %v553, 7
  %v555 = vsub.s32 0, %v554
  %v556 = vrot.slane %v552, %v555
  %v557 = vmul.f32 %v550, %v556
  %v558 = vmul.f32 %v551, %v556
  %v559 = vadd.f32 %v548, %v557
  %v560 = vadd.f32 %v549, %v558
  %v561 = vld [vmem:[#allocation2 + $0x9] sm:$0xff]
  %v562 = vld [vmem:[#allocation2 + $0x11] sm:$0xff]
  %v563 = vld [vmem:[%s7 + $0x6] sm:$0x1]
  %v564 = vlaneseq
  %v565 = vshrl.u32 %v564, 7
  %v566 = vsub.s32 0, %v565
  %v567 = vrot.slane %v563, %v566
  %v568 = vmul.f32 %v561, %v567
  %v569 = vmul.f32 %v562, %v567
  %v570 = vadd.f32 %v559, %v568
  %v571 = vadd.f32 %v560, %v569
  %v572 = vld [vmem:[#allocation2 + $0xa] sm:$0xff]
  %v573 = vld [vmem:[#allocation2 + $0x12] sm:$0xff]
  %v574 = vld [vmem:[%s7 + $0x7] sm:$0x1]
  %v575 = vlaneseq
  %v576 = vshrl.u32 %v575, 7
  %v577 = vsub.s32 0, %v576
  %v578 = vrot.slane %v574, %v577
  %v579 = vmul.f32 %v572, %v578
  %v580 = vmul.f32 %v573, %v578
  %v581 = vadd.f32 %v570, %v579
  %v582 = vadd.f32 %v571, %v580
  %v583 = vld [vmem:[#allocation2 + $0x13] sm:$0xff]
  %v584 = vld [vmem:[%s7 + $0x8] sm:$0x1]
  %v585 = vlaneseq
  %v586 = vshrl.u32 %v585, 7
  %v587 = vsub.s32 0, %v586
  %v588 = vrot.slane %v584, %v587
  %v589 = vmul.f32 %v498, %v588
  %v590 = vmul.f32 %v583, %v588
  %v591 = vadd.f32 %v581, %v589
  %v592 = vadd.f32 %v582, %v590
  %v593 = vld [vmem:[#allocation2 + $0x14] sm:$0xff]
  %v594 = vld [vmem:[%s7 + $0x9] sm:$0x1]
  %v595 = vlaneseq
  %v596 = vshrl.u32 %v595, 7
  %v597 = vsub.s32 0, %v596
  %v598 = vrot.slane %v594, %v597
  %v599 = vmul.f32 %v507, %v598
  %v600 = vmul.f32 %v593, %v598
  %v601 = vadd.f32 %v591, %v599
  %v602 = vadd.f32 %v592, %v600
  %v603 = vld [vmem:[#allocation2 + $0x15] sm:$0xff]
  %v604 = vld [vmem:[%s7 + $0xa] sm:$0x1]
  %v605 = vlaneseq
  %v606 = vshrl.u32 %v605, 7
  %v607 = vsub.s32 0, %v606
  %v608 = vrot.slane %v604, %v607
  %v609 = vmul.f32 %v518, %v608
  %v610 = vmul.f32 %v603, %v608
  %v611 = vadd.f32 %v601, %v609
  %v612 = vadd.f32 %v602, %v610
  %v613 = vld [vmem:[%s8] sm:$0xff]
  %v614 = vld [vmem:[%s8 + $0x8] sm:$0xff]
  %v615 = vld [vmem:[%s8 + $0x10] sm:$0xff]
  %v616 = vld [vmem:[%s8 + $0x18] sm:$0xff]
  %v617 = vld [vmem:[%s8 + $0x20] sm:$0xff]
  %v618 = vld [vmem:[%s8 + $0x28] sm:$0xff]
  %v619 = vld [vmem:[%s8 + $0x30] sm:$0xff]
  %v620 = vld [vmem:[%s8 + $0x38] sm:$0xff]
  %v621 = vld [vmem:[%s8 + $0x40] sm:$0xff]
  %v622 = vld [vmem:[%s8 + $0x48] sm:$0xff]
  %v623 = vld [vmem:[%s8 + $0x50] sm:$0xff]
  %v624 = vld [vmem:[%s8 + $0x58] sm:$0xff]
  %v625 = vld [vmem:[%s8 + $0x60] sm:$0xff]
  %v626 = vld [vmem:[%s8 + $0x68] sm:$0xff]
  %v627 = vld [vmem:[%s8 + $0x70] sm:$0xff]
  %v628 = vld [vmem:[%s8 + $0x78] sm:$0xff]
  %v629 = vld [vmem:[%s9] sm:$0x1]
  %v631 = vlaneseq
  %v632 = vshrl.u32 %v631, 7
  %v633 = vsub.s32 0, %v632
  %v634 = vrot.slane %v629, %v633
  %636 = vmatprep.subr.mxu0 0.0
  %637 = vmatpush1.msra.mxu0 %v613
  %638 = vmatprep.subr.mxu0 0.0
  %639 = vmatpush1.msra.mxu0 %v614
  %640 = vmatprep.subr.mxu0 0.0
  %641 = vmatpush1.msra.mxu0 %v615
  %642 = vmatprep.subr.mxu0 0.0
  %643 = vmatpush1.msra.mxu0 %v616
  %644 = vmatprep.subr.mxu0 0.0
  %645 = vmatpush1.msra.mxu0 %v617
  %646 = vmatprep.subr.mxu0 0.0
  %647 = vmatpush1.msra.mxu0 %v618
  %648 = vmatprep.subr.mxu0 0.0
  %649 = vmatpush1.msra.mxu0 %v619
  %650 = vmatprep.subr.mxu0 0.0
  %651 = vmatpush1.msra.mxu0 %v620
  %652 = vmatprep.subr.mxu0 0.0
  %653 = vmatpush1.msra.mxu0 %v621
  %654 = vmatprep.subr.mxu0 0.0
  %655 = vmatpush1.msra.mxu0 %v622
  %656 = vmatprep.subr.mxu0 0.0
  %657 = vmatpush1.msra.mxu0 %v623
  %658 = vmatprep.subr.mxu0 0.0
  %659 = vmatpush1.msra.mxu0 %v624
  %660 = vmatprep.subr.mxu0 0.0
  %661 = vmatpush1.msra.mxu0 %v625
  %662 = vmatprep.subr.mxu0 0.0
  %663 = vmatpush1.msra.mxu0 %v626
  %664 = vmatprep.subr.mxu0 0.0
  %665 = vmatpush1.msra.mxu0 %v627
  %666 = vmatprep.subr.mxu0 0.0
  %667 = vmatpush1.msra.mxu0 %v628
  %668 = vmatprep.subr.mxu0 0.0
  %669 = vmatpush1.msra.mxu0 0.0
  %670 = vmatprep.subr.mxu0 0.0
  %671 = vmatpush1.msra.mxu0 0.0
  %672 = vmatprep.subr.mxu0 0.0
  %673 = vmatpush1.msra.mxu0 0.0
  %674 = vmatprep.subr.mxu0 0.0
  %675 = vmatpush1.msra.mxu0 0.0
  %676 = vmatprep.subr.mxu0 0.0
  %677 = vmatpush1.msra.mxu0 0.0
  %678 = vmatprep.subr.mxu0 0.0
  %679 = vmatpush1.msra.mxu0 0.0
  %680 = vmatprep.subr.mxu0 0.0
  %681 = vmatpush1.msra.mxu0 0.0
  %682 = vmatprep.subr.mxu0 0.0
  %683 = vmatpush1.msra.mxu0 0.0
  %684 = vmatprep.subr.mxu0 0.0
  %685 = vmatpush1.msra.mxu0 0.0
  %686 = vmatprep.subr.mxu0 0.0
  %687 = vmatpush1.msra.mxu0 0.0
  %688 = vmatprep.subr.mxu0 0.0
  %689 = vmatpush1.msra.mxu0 0.0
  %690 = vmatprep.subr.mxu0 0.0
  %691 = vmatpush1.msra.mxu0 0.0
  %692 = vmatprep.subr.mxu0 0.0
  %693 = vmatpush1.msra.mxu0 0.0
  %694 = vmatprep.subr.mxu0 0.0
  %695 = vmatpush1.msra.mxu0 0.0
  %696 = vmatprep.subr.mxu0 0.0
  %697 = vmatpush1.msra.mxu0 0.0
  %698 = vmatprep.subr.mxu0 0.0
  %699 = vmatpush1.msra.mxu0 0.0
  %700 = vmatprep.mubr.f32.mxu0 0.0
  %701 = vmatmul.mubr.f32.gmra.mrb[0].mxu0 %v611
  %v702 = vpop.f32.mrb[0].mxu0
  %v703 = vadd.f32 %v634, %v702
  %v704 = vpop.f32.mrb[0].mxu0
  %705 = vmatprep.mubr.f32.mxu0 0.0
  %706 = vmatmul.mubr.f32.gmra.mrb[0].mxu0 %v612
  %v707 = vpop.f32.mrb[0].mxu0
  %v708 = vadd.f32 %v634, %v707
  %v709 = vpop.f32.mrb[0].mxu0
  %710 = vdwg.mxu0
  %v711 = vsub.f32 0.0, %v703
  %v712 = vsub.f32 0.0, %v708
  %v713 = vmul.f32 %v711, 1.442695
  %v714 = vpow.pop %v713
  %v715 = vmul.f32 %v712, 1.442695
  %v716 = vpow.pop %v715
  %v717 = vadd.f32 %v714, 1.0
  %v718 = vadd.f32 %v716, 1.0
  %v719 = vrcp.pop %v717
  %v720 = vmul.f32 1.0, %v719
  %v721 = vrcp.pop %v718
  %v722 = vmul.f32 1.0, %v721
  %v723 = vmul.f32 %v703, %v720
  %v724 = vmul.f32 %v708, %v722
  %v725 = vsub.f32 0.0, %v723
  %v726 = vsub.f32 0.0, %v724
  %v727 = vmul.f32 %v725, 1.442695
  %v728 = vpow.pop %v727
  %v729 = vmul.f32 %v726, 1.442695
  %v730 = vpow.pop %v729
  %v731 = vadd.f32 %v728, 1.0
  %v732 = vadd.f32 %v730, 1.0
  %v733 = vrcp.pop %v731
  %v734 = vmul.f32 1.0, %v733
  %v735 = vrcp.pop %v732
  %v736 = vmul.f32 1.0, %v735
  %737 = vst [vmem:[%s10] sm:$0xff] %v734
  %738 = vst [vmem:[%s10 + $0x8] sm:$0xff] %v736
  // Predicated region
  $region42: #{caa_forward.1} parent=0 // pred_check
    _
  $region43: #{caa_forward.1} parent=0 // pred_check_branch
    %740 = sbr.rel (0) target = $region45
  $region44: #{caa_forward.1} parent=0 // pred_region
    _
  $region45: #{caa_forward.1} parent=0 // pred_fallthru
    _
  // Predicated region
  $region46: #{caa_forward.1} parent=0 // pred_check
    _
  $region47: #{caa_forward.1} parent=0 // pred_check_branch
    %742 = sbr.rel (0) target = $region49
  $region48: #{caa_forward.1} parent=0 // pred_region
    _
  $region49: #{caa_forward.1} parent=0 // pred_fallthru
    _

</llo_original>
